<compile_context>
chip_gen: v7x
topology: tpu7x:2x2x1
jax: 0.10.0
libtpu: 0.0.40
codegen_flags: <defaults>
</compile_context>

<pallas_src>
import jax
import jax.numpy as jnp
from jax.experimental import pallas as pl
from jax.experimental.pallas import tpu as pltpu


def _round_up(n, m):
    return ((n + m - 1) // m) * m


def _augru_seq_kernel(x_ref, att_ref, h0_ref, wx_ref, wh_ru_ref, wh_h_ref, b_ref,
                      out_ref, h_scr):
    """One grid step = one time step for one batch block.

    x_ref     : [1, Bb, I]   streamed per step
    att_ref   : [1, Bb, 1]   streamed per step
    h0_ref    : [Bb, Hp]     initial hidden state (read once per batch block)
    wx_ref    : [I, 3*Hp]    x-side weights for (reset | update | candidate)
    wh_ru_ref : [Hp, 2*Hp]   h-side weights for (reset | update)
    wh_h_ref  : [Hp, Hp]     h-side weights for candidate
    b_ref     : [1, 3*Hp]    biases for (reset | update | candidate)
    out_ref   : [Bb, Hp]     final hidden state (written on the last time step)
    h_scr     : [Bb, Hp] f32 VMEM-carried hidden state
    """
    t = pl.program_id(1)
    Hp = h_scr.shape[-1]

    @pl.when(t == 0)
    def _():
        h_scr[...] = h0_ref[...].astype(jnp.float32)

    h = h_scr[...]                                     # [Bb, Hp] f32
    x = x_ref[0].astype(jnp.float32)                   # [Bb, I]
    att = att_ref[0].astype(jnp.float32)               # [Bb, 1]

    # x contribution to all three gates (bias folded in once).
    gx = (jnp.dot(x, wx_ref[...], preferred_element_type=jnp.float32)
          + b_ref[...])                                # [Bb, 3Hp]
    # h contribution to reset / update.
    gh = jnp.dot(h, wh_ru_ref[...], preferred_element_type=jnp.float32)  # [Bb, 2Hp]

    reset = jax.nn.sigmoid(gx[:, 0:Hp] + gh[:, 0:Hp])
    update = jax.nn.sigmoid(gx[:, Hp:2 * Hp] + gh[:, Hp:2 * Hp])

    h_hat = jnp.tanh(
        jnp.dot(h * reset, wh_h_ref[...], preferred_element_type=jnp.float32)
        + gx[:, 2 * Hp:3 * Hp]
    )

    # h_new = (1 - att*update) * h + att*update * h_hat, with implicit [Bb,1] broadcast.
    h_new = h + (att * update) * (h_hat - h)
    h_scr[...] = h_new

    @pl.when(t == pl.num_programs(1) - 1)
    def _():
        out_ref[...] = h_new.astype(out_ref.dtype)


def prepare_augru_params(params, input_dim, hidden_dim):
    """One-time weight re-layout (do NOT call per step).

    params: dict with W_r/W_u/W_h in PyTorch Linear layout
            [hidden_dim, hidden_dim + input_dim] (columns ordered as cat([h_prev, x]))
            and b_r/b_u/b_h of shape [hidden_dim].
    Returns pre-transposed, lane-padded (H -> Hp = mult of 128) tensors consumed
    by the kernel.  All padded rows/columns are zero, so padded h columns stay 0.
    """
    H, I = hidden_dim, input_dim
    Hp = _round_up(H, 128)

    def split_w(w):
        # PyTorch Linear: y = t @ W.T + b with t = cat([h_prev, x]).
        wt = jnp.transpose(w)                      # [H+I, H]
        return wt[:H, :], wt[H:, :]                # ([H, H], [I, H])

    wr_h, wr_x = split_w(params["W_r"])
    wu_h, wu_x = split_w(params["W_u"])
    wh_h, wh_x = split_w(params["W_h"])

    def pad2(m, rows, cols):
        out = jnp.zeros((rows, cols), m.dtype)
        return out.at[:m.shape[0], :m.shape[1]].set(m)

    def pad1(b):
        out = jnp.zeros((Hp,), b.dtype)
        return out.at[:H].set(b)

    # x-side weights for all three gates, each gate block 128-lane aligned.
    wx_all = jnp.concatenate(
        [pad2(wr_x, I, Hp), pad2(wu_x, I, Hp), pad2(wh_x, I, Hp)], axis=1)   # [I, 3Hp]
    # h-side weights for reset / update.
    wh_ru = jnp.concatenate(
        [pad2(wr_h, Hp, Hp), pad2(wu_h, Hp, Hp)], axis=1)                    # [Hp, 2Hp]
    # h-side weights for the candidate.
    wh_hh = pad2(wh_h, Hp, Hp)                                               # [Hp, Hp]

    b_all = jnp.concatenate(
        [pad1(params["b_r"]), pad1(params["b_u"]), pad1(params["b_h"])]
    ).reshape(1, 3 * Hp)                                                     # [1, 3Hp]

    return {"wx_all": wx_all, "wh_ru": wh_ru, "wh_h": wh_hh, "b_all": b_all,
            "H": H, "I": I, "Hp": Hp}


def augru_sequence(xs, h0, att, prep, *, batch_block=None):
    """Run the AUGRU cell over a whole sequence inside one kernel.

    xs  : [T, B, I]   att : [T, B, 1]   h0 : [B, H]
    Returns the final hidden state [B, H].
    """
    T, B, I = xs.shape
    H, Hp = prep["H"], prep["Hp"]
    assert h0.shape == (B, H) and att.shape == (T, B, 1) and I == prep["I"]

    bb = B if batch_block is None else batch_block
    assert B % bb == 0 and (bb == B or bb % 8 == 0), "batch block must tile B (mult of 8)"
    nb = B // bb

    # Pad the hidden lane axis once (zeros in columns H:Hp stay zero across steps).
    h0p = h0 if Hp == H else jnp.pad(h0, ((0, 0), (0, Hp - H)))

    out = pl.pallas_call(
        _augru_seq_kernel,
        out_shape=jax.ShapeDtypeStruct((B, Hp), h0.dtype),
        grid=(nb, T),
        in_specs=[
            pl.BlockSpec((1, bb, I), lambda b, t: (t, b, 0)),        # x_t   (streamed)
            pl.BlockSpec((1, bb, 1), lambda b, t: (t, b, 0)),        # att_t (streamed)
            pl.BlockSpec((bb, Hp), lambda b, t: (b, 0)),             # h0
            pl.BlockSpec((I, 3 * Hp), lambda b, t: (0, 0)),          # Wx_all  (resident)
            pl.BlockSpec((Hp, 2 * Hp), lambda b, t: (0, 0)),         # Wh_ru   (resident)
            pl.BlockSpec((Hp, Hp), lambda b, t: (0, 0)),             # Wh_h    (resident)
            pl.BlockSpec((1, 3 * Hp), lambda b, t: (0, 0)),          # b_all   (resident)
        ],
        out_specs=pl.BlockSpec((bb, Hp), lambda b, t: (b, 0)),
        scratch_shapes=[pltpu.VMEM((bb, Hp), jnp.float32)],
        compiler_params=pltpu.CompilerParams(
            dimension_semantics=("parallel", "arbitrary")),
    )(xs, att, h0p, prep["wx_all"], prep["wh_ru"], prep["wh_h"], prep["b_all"])

    return out if Hp == H else out[:, :H]


def augru_cell(x, h_prev, attention_score, prep):
    """Single AUGRU step (matches the PyTorch module forward). `prep` from
    prepare_augru_params()."""
    return augru_sequence(x[None], h_prev, attention_score[None], prep)


def _ref_augru(x, h_prev, att, params):
    """Pure-JAX reference mirroring the PyTorch forward."""
    ti = jnp.concatenate([h_prev, x], axis=-1)
    reset = jax.nn.sigmoid(ti @ params["W_r"].T + params["b_r"])
    update = jax.nn.sigmoid(ti @ params["W_u"].T + params["b_u"])
    ti2 = jnp.concatenate([h_prev * reset, x], axis=-1)
    h_hat = jnp.tanh(ti2 @ params["W_h"].T + params["b_h"])
    update = att * update
    return (1.0 - update) * h_prev + update * h_hat


if __name__ == "__main__":
    import numpy as np

    B, input_dim, hidden_dim, T = 8, 16, 32, 8
    gate_input_dim = input_dim + hidden_dim

    key = jax.random.PRNGKey(0)
    keys = jax.random.split(key, 12)

    std = 1.0 / np.sqrt(gate_input_dim)
    uni = lambda k, shape: jax.random.uniform(
        k, shape, dtype=jnp.float32, minval=-std, maxval=std)

    params = {
        "W_r": uni(keys[0], (hidden_dim, gate_input_dim)),
        "b_r": uni(keys[1], (hidden_dim,)),
        "W_u": uni(keys[2], (hidden_dim, gate_input_dim)),
        "b_u": uni(keys[3], (hidden_dim,)),
        "W_h": uni(keys[4], (hidden_dim, gate_input_dim)),
        "b_h": uni(keys[5], (hidden_dim,)),
    }

    x = jax.random.normal(keys[6], (B, input_dim), dtype=jnp.float32)
    h_prev = jax.random.normal(keys[7], (B, hidden_dim), dtype=jnp.float32)
    attention_score = jax.random.uniform(keys[8], (B, 1), dtype=jnp.float32)

    # One-time weight re-layout (hoisted out of the per-step path).
    prep = prepare_augru_params(params, input_dim, hidden_dim)

    # ---- single step: exactly the PyTorch module forward --------------------
    h_cur = augru_cell(x, h_prev, attention_score, prep)
    jax.block_until_ready(h_cur)
    h_ref = _ref_augru(x, h_prev, attention_score, params)
    np.testing.assert_allclose(np.asarray(h_cur), np.asarray(h_ref),
                               rtol=1e-5, atol=1e-5)

    # ---- full sequence: recurrence internalized in one pallas_call ----------
    xs = jax.random.normal(keys[9], (T, B, input_dim), dtype=jnp.float32)
    atts = jax.random.uniform(keys[10], (T, B, 1), dtype=jnp.float32)

    h_fin = augru_sequence(xs, h_prev, atts, prep)
    jax.block_until_ready(h_fin)

    def _scan_step(h, inp):
        xt, at = inp
        return _ref_augru(xt, h, at, params), None

    h_fin_ref, _ = jax.lax.scan(_scan_step, h_prev, (xs, atts))
    np.testing.assert_allclose(np.asarray(h_fin), np.asarray(h_fin_ref),
                               rtol=1e-5, atol=1e-5)

    print("KERNEL_OK")
</pallas_src>

<mosaic_0001>
module attributes {stable_mosaic.version = 11 : i64} {
  func.func @_augru_seq_kernel(%arg0: i32, %arg1: i32, %arg2: memref<1x8x16xf32, #tpu.memory_space<vmem>>, %arg3: memref<1x8x1xf32, #tpu.memory_space<vmem>>, %arg4: memref<8x128xf32, #tpu.memory_space<vmem>>, %arg5: memref<16x384xf32, #tpu.memory_space<vmem>>, %arg6: memref<128x256xf32, #tpu.memory_space<vmem>>, %arg7: memref<128x128xf32, #tpu.memory_space<vmem>>, %arg8: memref<1x384xf32, #tpu.memory_space<vmem>>, %arg9: memref<8x128xf32, #tpu.memory_space<vmem>>, %arg10: memref<8x128xf32, #tpu.memory_space<vmem>>) attributes {dimension_semantics = [#tpu.dimension_semantics<parallel>, #tpu.dimension_semantics<arbitrary>], iteration_bounds = array<i64: 1, 1>, scalar_prefetch = 0 : i64, scratch_operands = 1 : i64, tpu.core_type = #tpu.core_type<tc>, window_params = [{transform_indices = @transform_0, window_bounds = array<i64: 1, 8, 16>}, {transform_indices = @transform_1, window_bounds = array<i64: 1, 8, 1>}, {transform_indices = @transform_2, window_bounds = array<i64: 8, 128>}, {pipeline_mode = #tpu.pipeline_mode<synchronous>, transform_indices = @transform_3, window_bounds = array<i64: 16, 384>}, {pipeline_mode = #tpu.pipeline_mode<synchronous>, transform_indices = @transform_4, window_bounds = array<i64: 128, 256>}, {pipeline_mode = #tpu.pipeline_mode<synchronous>, transform_indices = @transform_5, window_bounds = array<i64: 128, 128>}, {pipeline_mode = #tpu.pipeline_mode<synchronous>, transform_indices = @transform_6, window_bounds = array<i64: 1, 384>}, {transform_indices = @transform_7, window_bounds = array<i64: 8, 128>}]} {
    %c0_i32 = arith.constant 0 : i32
    %0 = arith.cmpi eq, %arg1, %c0_i32 : i32
    %1 = arith.extui %0 : i1 to i32
    %c0_i32_0 = arith.constant 0 : i32
    %2 = arith.cmpi ne, %1, %c0_i32_0 : i32
    scf.if %2 {
      %c0_24 = arith.constant 0 : index
      %c0_25 = arith.constant 0 : index
      %46 = vector.load %arg4[%c0_24, %c0_25] : memref<8x128xf32, #tpu.memory_space<vmem>>, vector<8x128xf32>
      %c0_26 = arith.constant 0 : index
      %c0_27 = arith.constant 0 : index
      %47 = vector.load %arg10[%c0_26, %c0_27] : memref<8x128xf32, #tpu.memory_space<vmem>>, vector<8x128xf32>
      tpu.vector_store %arg10[%c0_26, %c0_27], %46 {strides = array<i32>} : memref<8x128xf32, #tpu.memory_space<vmem>>, vector<8x128xf32>,
    } else {
    }
    %c0 = arith.constant 0 : index
    %c0_1 = arith.constant 0 : index
    %3 = vector.load %arg10[%c0, %c0_1] : memref<8x128xf32, #tpu.memory_space<vmem>>, vector<8x128xf32>
    %c0_2 = arith.constant 0 : index
    %c0_3 = arith.constant 0 : index
    %c0_4 = arith.constant 0 : index
    %4 = vector.load %arg2[%c0_2, %c0_3, %c0_4] : memref<1x8x16xf32, #tpu.memory_space<vmem>>, vector<1x8x16xf32>
    %5 = vector.shape_cast %4 : vector<1x8x16xf32> to vector<8x16xf32>
    %c0_5 = arith.constant 0 : index
    %c0_6 = arith.constant 0 : index
    %c0_7 = arith.constant 0 : index
    %6 = vector.load %arg3[%c0_5, %c0_6, %c0_7] : memref<1x8x1xf32, #tpu.memory_space<vmem>>, vector<1x8x1xf32>
    %7 = vector.shape_cast %6 : vector<1x8x1xf32> to vector<8x1xf32>
    %c0_8 = arith.constant 0 : index
    %c0_9 = arith.constant 0 : index
    %8 = vector.load %arg5[%c0_8, %c0_9] : memref<16x384xf32, #tpu.memory_space<vmem>>, vector<16x384xf32>
    %cst = arith.constant dense<0.000000e+00> : vector<8x384xf32>
    %9 = tpu.matmul %5, %8, %cst {dimension_numbers = #tpu.dot_dimension_numbers<[1], [0], [0], [1], [0, 0, 1, 1], [], []>} : vector<8x16xf32>, vector<16x384xf32>, vector<8x384xf32> -> vector<8x384xf32>
    %c0_10 = arith.constant 0 : index
    %c0_11 = arith.constant 0 : index
    %10 = vector.load %arg8[%c0_10, %c0_11] : memref<1x384xf32, #tpu.memory_space<vmem>>, vector<1x384xf32>
    %11 = vector.broadcast %10 : vector<1x384xf32> to vector<8x384xf32>
    %12 = arith.addf %9, %11 : vector<8x384xf32>
    %c0_12 = arith.constant 0 : index
    %c0_13 = arith.constant 0 : index
    %13 = vector.load %arg6[%c0_12, %c0_13] : memref<128x256xf32, #tpu.memory_space<vmem>>, vector<128x256xf32>
    %cst_14 = arith.constant dense<0.000000e+00> : vector<8x256xf32>
    %14 = tpu.matmul %3, %13, %cst_14 {dimension_numbers = #tpu.dot_dimension_numbers<[1], [0], [0], [1], [0, 0, 1, 1], [], []>} : vector<8x128xf32>, vector<128x256xf32>, vector<8x256xf32> -> vector<8x256xf32>
    %15 = vector.extract_strided_slice %12 {offsets = [0, 0], sizes = [8, 128], strides = [1, 1]} : vector<8x384xf32> to vector<8x128xf32>
    %16 = vector.extract_strided_slice %14 {offsets = [0, 0], sizes = [8, 128], strides = [1, 1]} : vector<8x256xf32> to vector<8x128xf32>
    %17 = arith.addf %15, %16 : vector<8x128xf32>
    %18 = arith.negf %17 : vector<8x128xf32>
    %19 = math.exp %18 : vector<8x128xf32>
    %cst_15 = arith.constant 1.000000e+00 : f32
    %20 = vector.broadcast %cst_15 : f32 to vector<8x128xf32>
    %21 = arith.addf %20, %19 : vector<8x128xf32>
    %22 = arith.divf %20, %21 : vector<8x128xf32>
    %23 = vector.extract_strided_slice %12 {offsets = [0, 128], sizes = [8, 128], strides = [1, 1]} : vector<8x384xf32> to vector<8x128xf32>
    %24 = vector.extract_strided_slice %14 {offsets = [0, 128], sizes = [8, 128], strides = [1, 1]} : vector<8x256xf32> to vector<8x128xf32>
    %25 = arith.addf %23, %24 : vector<8x128xf32>
    %26 = arith.negf %25 : vector<8x128xf32>
    %27 = math.exp %26 : vector<8x128xf32>
    %cst_16 = arith.constant 1.000000e+00 : f32
    %28 = vector.broadcast %cst_16 : f32 to vector<8x128xf32>
    %29 = arith.addf %28, %27 : vector<8x128xf32>
    %30 = arith.divf %28, %29 : vector<8x128xf32>
    %31 = arith.mulf %3, %22 : vector<8x128xf32>
    %c0_17 = arith.constant 0 : index
    %c0_18 = arith.constant 0 : index
    %32 = vector.load %arg7[%c0_17, %c0_18] : memref<128x128xf32, #tpu.memory_space<vmem>>, vector<128x128xf32>
    %cst_19 = arith.constant dense<0.000000e+00> : vector<8x128xf32>
    %33 = tpu.matmul %31, %32, %cst_19 {dimension_numbers = #tpu.dot_dimension_numbers<[1], [0], [0], [1], [0, 0, 1, 1], [], []>} : vector<8x128xf32>, vector<128x128xf32>, vector<8x128xf32> -> vector<8x128xf32>
    %34 = vector.extract_strided_slice %12 {offsets = [0, 256], sizes = [8, 128], strides = [1, 1]} : vector<8x384xf32> to vector<8x128xf32>
    %35 = arith.addf %33, %34 : vector<8x128xf32>
    %36 = math.tanh %35 : vector<8x128xf32>
    %37 = vector.broadcast %7 : vector<8x1xf32> to vector<8x128xf32>
    %38 = arith.mulf %37, %30 : vector<8x128xf32>
    %39 = arith.subf %36, %3 : vector<8x128xf32>
    %40 = arith.mulf %38, %39 : vector<8x128xf32>
    %41 = arith.addf %3, %40 : vector<8x128xf32>
    %c0_20 = arith.constant 0 : index
    %c0_21 = arith.constant 0 : index
    %42 = vector.load %arg10[%c0_20, %c0_21] : memref<8x128xf32, #tpu.memory_space<vmem>>, vector<8x128xf32>
    tpu.vector_store %arg10[%c0_20, %c0_21], %41 {strides = array<i32>} : memref<8x128xf32, #tpu.memory_space<vmem>>, vector<8x128xf32>,
    %c0_i32_22 = arith.constant 0 : i32
    %43 = arith.cmpi eq, %arg1, %c0_i32_22 : i32
    %44 = arith.extui %43 : i1 to i32
    %c0_i32_23 = arith.constant 0 : i32
    %45 = arith.cmpi ne, %44, %c0_i32_23 : i32
    scf.if %45 {
      %c0_24 = arith.constant 0 : index
      %c0_25 = arith.constant 0 : index
      %46 = vector.load %arg9[%c0_24, %c0_25] : memref<8x128xf32, #tpu.memory_space<vmem>>, vector<8x128xf32>
      tpu.vector_store %arg9[%c0_24, %c0_25], %41 {strides = array<i32>} : memref<8x128xf32, #tpu.memory_space<vmem>>, vector<8x128xf32>,
    } else {
    }
    return
  }
  func.func @transform_0(%arg0: i32, %arg1: i32) -> (i32, i32, i32) {
    %c0_i32 = arith.constant 0 : i32
    %c0_i32_0 = arith.constant 0 : i32
    return %arg1, %arg0, %c0_i32 : i32, i32, i32
  }
  func.func @transform_1(%arg0: i32, %arg1: i32) -> (i32, i32, i32) {
    %c0_i32 = arith.constant 0 : i32
    %c0_i32_0 = arith.constant 0 : i32
    return %arg1, %arg0, %c0_i32 : i32, i32, i32
  }
  func.func @transform_2(%arg0: i32, %arg1: i32) -> (i32, i32) {
    %c0_i32 = arith.constant 0 : i32
    %c0_i32_0 = arith.constant 0 : i32
    return %arg0, %c0_i32 : i32, i32
  }
  func.func @transform_3(%arg0: i32, %arg1: i32) -> (i32, i32) {
    %c0_i32 = arith.constant 0 : i32
    %c0_i32_0 = arith.constant 0 : i32
    %c0_i32_1 = arith.constant 0 : i32
    return %c0_i32, %c0_i32_0 : i32, i32
  }
  func.func @transform_4(%arg0: i32, %arg1: i32) -> (i32, i32) {
    %c0_i32 = arith.constant 0 : i32
    %c0_i32_0 = arith.constant 0 : i32
    %c0_i32_1 = arith.constant 0 : i32
    return %c0_i32, %c0_i32_0 : i32, i32
  }
  func.func @transform_5(%arg0: i32, %arg1: i32) -> (i32, i32) {
    %c0_i32 = arith.constant 0 : i32
    %c0_i32_0 = arith.constant 0 : i32
    %c0_i32_1 = arith.constant 0 : i32
    return %c0_i32, %c0_i32_0 : i32, i32
  }
  func.func @transform_6(%arg0: i32, %arg1: i32) -> (i32, i32) {
    %c0_i32 = arith.constant 0 : i32
    %c0_i32_0 = arith.constant 0 : i32
    %c0_i32_1 = arith.constant 0 : i32
    return %c0_i32, %c0_i32_0 : i32, i32
  }
  func.func @transform_7(%arg0: i32, %arg1: i32) -> (i32, i32) {
    %c0_i32 = arith.constant 0 : i32
    %c0_i32_0 = arith.constant 0 : i32
    return %arg0, %c0_i32 : i32, i32
  }
}

</mosaic_0001>

<llo_original>
// kernel: tpu_custom_call.1
$region0: #{tpu_custom_call.1}
  #allocation0 [shape = 'u32[]', space=smem, size = 0x4, offset = 0x4, fixed_abs, tag = 'smem constant byte address 0x4 - core index']
  #allocation1 [shape = 'u32[144,128]{1,0:T(1,128)}', space=vmem, size = 0x12000, scoped, tag = 'internal scratch']
  #allocation2 [shape = 'f32[8,128]{1,0:T(8,128)}', space=vmem, size = 0x1000, scoped, tag = 'scratch operand']
  %s0 = inlined_call_operand.vmem [shape: f32[1,8,16], index: 0, kind: input, shape index: {}]
  %s1 = inlined_call_operand.vmem [shape: f32[1,8,1], index: 1, kind: input, shape index: {}]
  %s2 = inlined_call_operand.vmem [shape: f32[8,128], index: 2, kind: input, shape index: {}]
  %s3 = inlined_call_operand.hbm [shape: f32[16,384], index: 3, kind: input, shape index: {}]
  %s4 = inlined_call_operand.hbm [shape: f32[128,256], index: 4, kind: input, shape index: {}]
  %s5 = inlined_call_operand.hbm [shape: f32[128,128], index: 5, kind: input, shape index: {}]
  %s6 = inlined_call_operand.vmem [shape: f32[1,384], index: 6, kind: input, shape index: {}]
  %s7 = inlined_call_operand.hbm [shape: f32[8,128], index: 7, kind: output, shape index: {}]
  %s8 = sld [smem:[#allocation0]]
  $region58: #{tpu_custom_call.1} parent=0
    _
  %s10 = ssub.s32 1, %s8
  %s11 = scalar_select 0, %s10, %s8
  $region1: #{tpu_custom_call.1} parent=0
    #allocation3 [shape = 'u8[24576]{0}', space=vmem, size = 0x6000, scoped, tag = 'input window, operand 3, single buffered']
    #allocation4 [shape = 's32[1]{0}', space=sflag, size = 0x4, scoped, tag = 'scoped memory for tpu_custom_call.1']
    #allocation5 [shape = 's32[1]{0}', space=sflag, size = 0x4, scoped, tag = 'scoped memory for tpu_custom_call.1']
    #allocation6 [shape = 'u8[131072]{0}', space=vmem, size = 0x20000, scoped, tag = 'input window, operand 4, single buffered']
    #allocation7 [shape = 's32[1]{0}', space=sflag, size = 0x4, scoped, tag = 'scoped memory for tpu_custom_call.1']
    #allocation8 [shape = 'u8[65536]{0}', space=vmem, size = 0x10000, scoped, tag = 'input window, operand 5, single buffered']
    #allocation9 [shape = 'u8[4096]{0}', space=vmem, size = 0x1000, scoped, tag = 'output window, operand 0, single buffered']
    %12 = vsyncpa [#allocation4], 0
    %13 = vsyncpa [#allocation7], 0
    %14 = vsyncpa [#allocation5], 0
    // Predicated region
    $region2: #{tpu_custom_call.1} parent=1 // pred_check
      _
    $region3: #{tpu_custom_call.1} parent=1 // pred_check_branch
      %16 = sbr.rel (0) target = $region5
    $region4: #{tpu_custom_call.1} parent=1 // pred_region
      _
    $region5: #{tpu_custom_call.1} parent=1 // pred_fallthru
      _
    // Predicated region
    $region6: #{tpu_custom_call.1} parent=1 // pred_check
      _
    $region7: #{tpu_custom_call.1} parent=1 // pred_check_branch
      %18 = sbr.rel (0) target = $region9
    $region8: #{tpu_custom_call.1} parent=1 // pred_region
      _
    $region9: #{tpu_custom_call.1} parent=1 // pred_fallthru
      _
    // Predicated region
    $region10: #{tpu_custom_call.1} parent=1 // pred_check
      _
    $region11: #{tpu_custom_call.1} parent=1 // pred_check_branch
      %20 = sbr.rel (0) target = $region13
    $region12: #{tpu_custom_call.1} parent=1 // pred_region
      _
    $region13: #{tpu_custom_call.1} parent=1 // pred_fallthru
      _
    // Predicated region
    $region14: #{tpu_custom_call.1} parent=1 // pred_check
      _
    $region15: #{tpu_custom_call.1} parent=1 // pred_check_branch
      %22 = sbr.rel (0) target = $region17
    $region16: #{tpu_custom_call.1} parent=1 // pred_region
      %s24 = ssub.s32 768, 768
      %25 = vsyncadd [#allocation4], %s24
      %s26 = sshll.u32 [#allocation3], 4
      %s27 = int_to_ptr.vmem [resolvable:$true] %s26
      %32 = dma.hbm_to_vmem [thread:$0]  %s3, 768, %s27, [#allocation4], 384, 384, 24
    $region17: #{tpu_custom_call.1} parent=1 // pred_fallthru
      _
    // Predicated region
    $region18: #{tpu_custom_call.1} parent=1 // pred_check
      _
    $region19: #{tpu_custom_call.1} parent=1 // pred_check_branch
      %34 = sbr.rel (0) target = $region21
    $region20: #{tpu_custom_call.1} parent=1 // pred_region
      %s36 = ssub.s32 4096, 4096
      %37 = vsyncadd [#allocation7], %s36
      %s38 = sshll.u32 [#allocation6], 4
      %s39 = int_to_ptr.vmem [resolvable:$true] %s38
      %44 = dma.hbm_to_vmem [thread:$0]  %s4, 4096, %s39, [#allocation7], 256, 256, 16
    $region21: #{tpu_custom_call.1} parent=1 // pred_fallthru
      _
    // Predicated region
    $region22: #{tpu_custom_call.1} parent=1 // pred_check
      _
    $region23: #{tpu_custom_call.1} parent=1 // pred_check_branch
      %46 = sbr.rel (0) target = $region25
    $region24: #{tpu_custom_call.1} parent=1 // pred_region
      %s48 = ssub.s32 2048, 2048
      %49 = vsyncadd [#allocation7], %s48
      %s50 = sshll.u32 [#allocation8], 4
      %s51 = int_to_ptr.vmem [resolvable:$true] %s50
      %56 = dma.hbm_to_vmem [thread:$0]  %s5, 2048, %s51, [#allocation7], 128, 128, 8
    $region25: #{tpu_custom_call.1} parent=1 // pred_fallthru
      _
    // Predicated region
    $region26: #{tpu_custom_call.1} parent=1 // pred_check
      _
    $region27: #{tpu_custom_call.1} parent=1 // pred_check_branch
      %58 = sbr.rel (0) target = $region29
    $region28: #{tpu_custom_call.1} parent=1 // pred_region
      _
    $region29: #{tpu_custom_call.1} parent=1 // pred_fallthru
      _
    // Predicated region
    $region30: #{tpu_custom_call.1} parent=1 // pred_check
      _
    $region31: #{tpu_custom_call.1} parent=1 // pred_check_branch
      %60 = sbr.rel (0) target = $region33
    $region32: #{tpu_custom_call.1} parent=1 // pred_region
      %61 = dma.done [#allocation4], 768
    $region33: #{tpu_custom_call.1} parent=1 // pred_fallthru
      _
    // Predicated region
    $region34: #{tpu_custom_call.1} parent=1 // pred_check
      _
    $region35: #{tpu_custom_call.1} parent=1 // pred_check_branch
      %63 = sbr.rel (0) target = $region37
    $region36: #{tpu_custom_call.1} parent=1 // pred_region
      %64 = dma.done [#allocation7], 4096
    $region37: #{tpu_custom_call.1} parent=1 // pred_fallthru
      _
    // Predicated region
    $region38: #{tpu_custom_call.1} parent=1 // pred_check
      _
    $region39: #{tpu_custom_call.1} parent=1 // pred_check_branch
      %66 = sbr.rel (0) target = $region41
    $region40: #{tpu_custom_call.1} parent=1 // pred_region
      %67 = dma.done [#allocation7], 2048
    $region41: #{tpu_custom_call.1} parent=1 // pred_fallthru
      _
    %p68 = scmp.eq.s32.totalorder 0, 0
    // Predicated region
    $region42: #{tpu_custom_call.1} parent=1 // pred_check
      %p69 = pneg %p68
    $region43: #{tpu_custom_call.1} parent=1 // pred_check_branch
      %71 = sbr.rel (%p69) target = $region45
    $region44: #{tpu_custom_call.1} parent=1 // pred_region
      %v72 = vld [vmem:[%s2] sm:$0xff]
      %73 = vst [vmem:[#allocation2] sm:$0xff] %v72
    $region45: #{tpu_custom_call.1} parent=1 // pred_fallthru
      _
    %v74 = vld [vmem:[#allocation2] sm:$0xff]
    %v75 = vld [vmem:[%s0] sm:$0xff]
    %v76 = vld [vmem:[%s1] sm:$0xff]
    %v77 = vld [vmem:[#allocation3] sm:$0xff]
    %v78 = vld [vmem:[#allocation3 + $0x8] sm:$0xff]
    %v79 = vld [vmem:[#allocation3 + $0x10] sm:$0xff]
    %v80 = vld [vmem:[#allocation3 + $0x18] sm:$0xff]
    %v81 = vld [vmem:[#allocation3 + $0x20] sm:$0xff]
    %v82 = vld [vmem:[#allocation3 + $0x28] sm:$0xff]
    %v83 = vld [vmem:[%s6] sm:$0x7]
    %v85 = vlaneseq
    %v86 = vshrl.u32 %v85, 7
    %v87 = vsub.s32 0, %v86
    %v88 = vrot.slane %v83, %v87
    %v89 = vlaneseq
    %v90 = vshrl.u32 %v89, 7
    %v91 = vsub.s32 1, %v90
    %v92 = vrot.slane %v83, %v91
    %v93 = vlaneseq
    %v94 = vshrl.u32 %v93, 7
    %v95 = vsub.s32 2, %v94
    %v96 = vrot.slane %v83, %v95
    %vm100 = vcmask 130048
    %v102 = vsel %vm100, %v75, 0
    %104 = vmatprep.subr.mxu0 %v78
    %105 = vmatpush1.msra.mxu0 %v77
    %106 = vmatprep.subr.mxu0 %v81
    %107 = vmatpush1.msra.mxu0 %v80
    %108 = vmatprep.subr.mxu0 0.0
    %109 = vmatpush1.msra.mxu0 0.0
    %110 = vmatprep.subr.mxu0 0.0
    %111 = vmatpush1.msra.mxu0 0.0
    %112 = vmatprep.subr.mxu0 0.0
    %113 = vmatpush1.msra.mxu0 0.0
    %114 = vmatprep.subr.mxu0 0.0
    %115 = vmatpush1.msra.mxu0 0.0
    %116 = vmatprep.subr.mxu0 0.0
    %117 = vmatpush1.msra.mxu0 0.0
    %118 = vmatprep.subr.mxu0 0.0
    %119 = vmatpush1.msra.mxu0 0.0
    %120 = vmatprep.subr.mxu0 0.0
    %121 = vmatpush1.msra.mxu0 0.0
    %122 = vmatprep.subr.mxu0 0.0
    %123 = vmatpush1.msra.mxu0 0.0
    %124 = vmatprep.subr.mxu0 0.0
    %125 = vmatpush1.msra.mxu0 0.0
    %126 = vmatprep.subr.mxu0 0.0
    %127 = vmatpush1.msra.mxu0 0.0
    %128 = vmatprep.subr.mxu0 0.0
    %129 = vmatpush1.msra.mxu0 0.0
    %130 = vmatprep.subr.mxu0 0.0
    %131 = vmatpush1.msra.mxu0 0.0
    %132 = vmatprep.subr.mxu0 0.0
    %133 = vmatpush1.msra.mxu0 0.0
    %134 = vmatprep.subr.mxu0 0.0
    %135 = vmatpush1.msra.mxu0 0.0
    %136 = vmatprep.subr.mxu0 0.0
    %137 = vmatpush1.msra.mxu0 0.0
    %138 = vmatprep.subr.mxu0 0.0
    %139 = vmatpush1.msra.mxu0 0.0
    %140 = vmatprep.subr.mxu0 0.0
    %141 = vmatpush1.msra.mxu0 0.0
    %142 = vmatprep.subr.mxu0 0.0
    %143 = vmatpush1.msra.mxu0 0.0
    %144 = vmatprep.subr.mxu0 0.0
    %145 = vmatpush1.msra.mxu0 0.0
    %146 = vmatprep.subr.mxu0 0.0
    %147 = vmatpush1.msra.mxu0 0.0
    %148 = vmatprep.subr.mxu0 0.0
    %149 = vmatpush1.msra.mxu0 0.0
    %150 = vmatprep.subr.mxu0 0.0
    %151 = vmatpush1.msra.mxu0 0.0
    %152 = vmatprep.subr.mxu0 0.0
    %153 = vmatpush1.msra.mxu0 0.0
    %154 = vmatprep.subr.mxu0 0.0
    %155 = vmatpush1.msra.mxu0 0.0
    %156 = vmatprep.subr.mxu0 0.0
    %157 = vmatpush1.msra.mxu0 0.0
    %158 = vmatprep.subr.mxu0 0.0
    %159 = vmatpush1.msra.mxu0 0.0
    %160 = vmatprep.subr.mxu0 0.0
    %161 = vmatpush1.msra.mxu0 0.0
    %162 = vmatprep.subr.mxu0 0.0
    %163 = vmatpush1.msra.mxu0 0.0
    %164 = vmatprep.subr.mxu0 0.0
    %165 = vmatpush1.msra.mxu0 0.0
    %166 = vmatprep.subr.mxu0 0.0
    %167 = vmatpush1.msra.mxu0 0.0
    %168 = vmatprep.mubr.f32.mxu0 0.0
    %169 = vmatmul.mubr.f32.gmra.mrb[0].mxu0 %v102
    %v170 = vpop.f32.mrb[0].mxu0
    %v171 = vadd.f32 %v88, %v170
    %v172 = vpop.f32.mrb[0].mxu0
    %v173 = vadd.f32 %v92, %v172
    %174 = vdwg.mxu0
    %175 = vmatprep.subr.mxu0 0.0
    %176 = vmatpush1.msra.mxu0 %v79
    %177 = vmatprep.subr.mxu0 0.0
    %178 = vmatpush1.msra.mxu0 %v82
    %179 = vmatprep.subr.mxu0 0.0
    %180 = vmatpush1.msra.mxu0 0.0
    %181 = vmatprep.subr.mxu0 0.0
    %182 = vmatpush1.msra.mxu0 0.0
    %183 = vmatprep.subr.mxu0 0.0
    %184 = vmatpush1.msra.mxu0 0.0
    %185 = vmatprep.subr.mxu0 0.0
    %186 = vmatpush1.msra.mxu0 0.0
    %187 = vmatprep.subr.mxu0 0.0
    %188 = vmatpush1.msra.mxu0 0.0
    %189 = vmatprep.subr.mxu0 0.0
    %190 = vmatpush1.msra.mxu0 0.0
    %191 = vmatprep.subr.mxu0 0.0
    %192 = vmatpush1.msra.mxu0 0.0
    %193 = vmatprep.subr.mxu0 0.0
    %194 = vmatpush1.msra.mxu0 0.0
    %195 = vmatprep.subr.mxu0 0.0
    %196 = vmatpush1.msra.mxu0 0.0
    %197 = vmatprep.subr.mxu0 0.0
    %198 = vmatpush1.msra.mxu0 0.0
    %199 = vmatprep.subr.mxu0 0.0
    %200 = vmatpush1.msra.mxu0 0.0
    %201 = vmatprep.subr.mxu0 0.0
    %202 = vmatpush1.msra.mxu0 0.0
    %203 = vmatprep.subr.mxu0 0.0
    %204 = vmatpush1.msra.mxu0 0.0
    %205 = vmatprep.subr.mxu0 0.0
    %206 = vmatpush1.msra.mxu0 0.0
    %207 = vmatprep.subr.mxu0 0.0
    %208 = vmatpush1.msra.mxu0 0.0
    %209 = vmatprep.subr.mxu0 0.0
    %210 = vmatpush1.msra.mxu0 0.0
    %211 = vmatprep.subr.mxu0 0.0
    %212 = vmatpush1.msra.mxu0 0.0
    %213 = vmatprep.subr.mxu0 0.0
    %214 = vmatpush1.msra.mxu0 0.0
    %215 = vmatprep.subr.mxu0 0.0
    %216 = vmatpush1.msra.mxu0 0.0
    %217 = vmatprep.subr.mxu0 0.0
    %218 = vmatpush1.msra.mxu0 0.0
    %219 = vmatprep.subr.mxu0 0.0
    %220 = vmatpush1.msra.mxu0 0.0
    %221 = vmatprep.subr.mxu0 0.0
    %222 = vmatpush1.msra.mxu0 0.0
    %223 = vmatprep.subr.mxu0 0.0
    %224 = vmatpush1.msra.mxu0 0.0
    %225 = vmatprep.subr.mxu0 0.0
    %226 = vmatpush1.msra.mxu0 0.0
    %227 = vmatprep.subr.mxu0 0.0
    %228 = vmatpush1.msra.mxu0 0.0
    %229 = vmatprep.subr.mxu0 0.0
    %230 = vmatpush1.msra.mxu0 0.0
    %231 = vmatprep.subr.mxu0 0.0
    %232 = vmatpush1.msra.mxu0 0.0
    %233 = vmatprep.subr.mxu0 0.0
    %234 = vmatpush1.msra.mxu0 0.0
    %235 = vmatprep.subr.mxu0 0.0
    %236 = vmatpush1.msra.mxu0 0.0
    %237 = vmatprep.subr.mxu0 0.0
    %238 = vmatpush1.msra.mxu0 0.0
    %239 = vmatprep.mubr.f32.mxu0 0.0
    %240 = vmatmul.mubr.f32.gmra.mrb[0].mxu0 %v102
    %v241 = vpop.f32.mrb[0].mxu0
    %v242 = vadd.f32 %v96, %v241
    %v243 = vpop.f32.mrb[0].mxu0
    %244 = vdwg.mxu0
    %v245 = vld [vmem:[#allocation6] sm:$0xff]
    %v246 = vld [vmem:[#allocation6 + $0x8] sm:$0xff]
    %v247 = vld [vmem:[#allocation6 + $0x10] sm:$0xff]
    %v248 = vld [vmem:[#allocation6 + $0x18] sm:$0xff]
    %v249 = vld [vmem:[#allocation6 + $0x20] sm:$0xff]
    %v250 = vld [vmem:[#allocation6 + $0x28] sm:$0xff]
    %v251 = vld [vmem:[#allocation6 + $0x30] sm:$0xff]
    %v252 = vld [vmem:[#allocation6 + $0x38] sm:$0xff]
    %v253 = vld [vmem:[#allocation6 + $0x40] sm:$0xff]
    %v254 = vld [vmem:[#allocation6 + $0x48] sm:$0xff]
    %v255 = vld [vmem:[#allocation6 + $0x50] sm:$0xff]
    %v256 = vld [vmem:[#allocation6 + $0x58] sm:$0xff]
    %v257 = vld [vmem:[#allocation6 + $0x60] sm:$0xff]
    %v258 = vld [vmem:[#allocation6 + $0x68] sm:$0xff]
    %v259 = vld [vmem:[#allocation6 + $0x70] sm:$0xff]
    %v260 = vld [vmem:[#allocation6 + $0x78] sm:$0xff]
    %v261 = vld [vmem:[#allocation6 + $0x80] sm:$0xff]
    %v262 = vld [vmem:[#allocation6 + $0x88] sm:$0xff]
    %v263 = vld [vmem:[#allocation6 + $0x90] sm:$0xff]
    %v264 = vld [vmem:[#allocation6 + $0x98] sm:$0xff]
    %v265 = vld [vmem:[#allocation6 + $0xa0] sm:$0xff]
    %v266 = vld [vmem:[#allocation6 + $0xa8] sm:$0xff]
    %v267 = vld [vmem:[#allocation6 + $0xb0] sm:$0xff]
    %v268 = vld [vmem:[#allocation6 + $0xb8] sm:$0xff]
    %v269 = vld [vmem:[#allocation6 + $0xc0] sm:$0xff]
    %v270 = vld [vmem:[#allocation6 + $0xc8] sm:$0xff]
    %v271 = vld [vmem:[#allocation6 + $0xd0] sm:$0xff]
    %v272 = vld [vmem:[#allocation6 + $0xd8] sm:$0xff]
    %v273 = vld [vmem:[#allocation6 + $0xe0] sm:$0xff]
    %v274 = vld [vmem:[#allocation6 + $0xe8] sm:$0xff]
    %v275 = vld [vmem:[#allocation6 + $0xf0] sm:$0xff]
    %v276 = vld [vmem:[#allocation6 + $0xf8] sm:$0xff]
    %277 = vmatprep.subr.mxu0 %v246
    %278 = vmatpush1.msra.mxu0 %v245
    %279 = vmatprep.subr.mxu0 %v248
    %280 = vmatpush1.msra.mxu0 %v247
    %281 = vmatprep.subr.mxu0 %v250
    %282 = vmatpush1.msra.mxu0 %v249
    %283 = vmatprep.subr.mxu0 %v252
    %284 = vmatpush1.msra.mxu0 %v251
    %285 = vmatprep.subr.mxu0 %v254
    %286 = vmatpush1.msra.mxu0 %v253
    %287 = vmatprep.subr.mxu0 %v256
    %288 = vmatpush1.msra.mxu0 %v255
    %289 = vmatprep.subr.mxu0 %v258
    %290 = vmatpush1.msra.mxu0 %v257
    %291 = vmatprep.subr.mxu0 %v260
    %292 = vmatpush1.msra.mxu0 %v259
    %293 = vmatprep.subr.mxu0 %v262
    %294 = vmatpush1.msra.mxu0 %v261
    %295 = vmatprep.subr.mxu0 %v264
    %296 = vmatpush1.msra.mxu0 %v263
    %297 = vmatprep.subr.mxu0 %v266
    %298 = vmatpush1.msra.mxu0 %v265
    %299 = vmatprep.subr.mxu0 %v268
    %300 = vmatpush1.msra.mxu0 %v267
    %301 = vmatprep.subr.mxu0 %v270
    %302 = vmatpush1.msra.mxu0 %v269
    %303 = vmatprep.subr.mxu0 %v272
    %304 = vmatpush1.msra.mxu0 %v271
    %305 = vmatprep.subr.mxu0 %v274
    %306 = vmatpush1.msra.mxu0 %v273
    %307 = vmatprep.subr.mxu0 %v276
    %308 = vmatpush1.msra.mxu0 %v275
    %309 = vmatprep.subr.mxu0 0.0
    %310 = vmatpush1.msra.mxu0 0.0
    %311 = vmatprep.subr.mxu0 0.0
    %312 = vmatpush1.msra.mxu0 0.0
    %313 = vmatprep.subr.mxu0 0.0
    %314 = vmatpush1.msra.mxu0 0.0
    %315 = vmatprep.subr.mxu0 0.0
    %316 = vmatpush1.msra.mxu0 0.0
    %317 = vmatprep.subr.mxu0 0.0
    %318 = vmatpush1.msra.mxu0 0.0
    %319 = vmatprep.subr.mxu0 0.0
    %320 = vmatpush1.msra.mxu0 0.0
    %321 = vmatprep.subr.mxu0 0.0
    %322 = vmatpush1.msra.mxu0 0.0
    %323 = vmatprep.subr.mxu0 0.0
    %324 = vmatpush1.msra.mxu0 0.0
    %325 = vmatprep.subr.mxu0 0.0
    %326 = vmatpush1.msra.mxu0 0.0
    %327 = vmatprep.subr.mxu0 0.0
    %328 = vmatpush1.msra.mxu0 0.0
    %329 = vmatprep.subr.mxu0 0.0
    %330 = vmatpush1.msra.mxu0 0.0
    %331 = vmatprep.subr.mxu0 0.0
    %332 = vmatpush1.msra.mxu0 0.0
    %333 = vmatprep.subr.mxu0 0.0
    %334 = vmatpush1.msra.mxu0 0.0
    %335 = vmatprep.subr.mxu0 0.0
    %336 = vmatpush1.msra.mxu0 0.0
    %337 = vmatprep.subr.mxu0 0.0
    %338 = vmatpush1.msra.mxu0 0.0
    %339 = vmatprep.subr.mxu0 0.0
    %340 = vmatpush1.msra.mxu0 0.0
    %341 = vmatprep.mubr.f32.mxu0 0.0
    %342 = vmatmul.mubr.f32.gmra.mrb[0].mxu0 %v74
    %v343 = vpop.f32.mrb[0].mxu0
    %v344 = vadd.f32 0.0, %v343
    %v345 = vpop.f32.mrb[0].mxu0
    %v346 = vadd.f32 0.0, %v345
    %347 = vdwg.mxu0
    %v348 = vadd.f32 %v171, %v344
    %v349 = vxor.u32 %v348, 2147483648
    %v350 = vmul.f32 %v349, 1.442695
    %v351 = vpow.pop %v350
    %v352 = vadd.f32 %v351, 1.0
    %v353 = vrcp.pop %v352
    %v354 = vmul.f32 1.0, %v353
    %v355 = vadd.f32 %v173, %v346
    %v356 = vxor.u32 %v355, 2147483648
    %v357 = vmul.f32 %v356, 1.442695
    %v358 = vpow.pop %v357
    %v359 = vadd.f32 %v358, 1.0
    %v360 = vrcp.pop %v359
    %v361 = vmul.f32 1.0, %v360
    %v362 = vmul.f32 %v74, %v354
    %v363 = vld [vmem:[#allocation8] sm:$0xff]
    %v364 = vld [vmem:[#allocation8 + $0x8] sm:$0xff]
    %v365 = vld [vmem:[#allocation8 + $0x10] sm:$0xff]
    %v366 = vld [vmem:[#allocation8 + $0x18] sm:$0xff]
    %v367 = vld [vmem:[#allocation8 + $0x20] sm:$0xff]
    %v368 = vld [vmem:[#allocation8 + $0x28] sm:$0xff]
    %v369 = vld [vmem:[#allocation8 + $0x30] sm:$0xff]
    %v370 = vld [vmem:[#allocation8 + $0x38] sm:$0xff]
    %v371 = vld [vmem:[#allocation8 + $0x40] sm:$0xff]
    %v372 = vld [vmem:[#allocation8 + $0x48] sm:$0xff]
    %v373 = vld [vmem:[#allocation8 + $0x50] sm:$0xff]
    %v374 = vld [vmem:[#allocation8 + $0x58] sm:$0xff]
    %v375 = vld [vmem:[#allocation8 + $0x60] sm:$0xff]
    %v376 = vld [vmem:[#allocation8 + $0x68] sm:$0xff]
    %v377 = vld [vmem:[#allocation8 + $0x70] sm:$0xff]
    %v378 = vld [vmem:[#allocation8 + $0x78] sm:$0xff]
    %379 = vmatprep.subr.mxu0 0.0
    %380 = vmatpush1.msra.mxu0 %v363
    %381 = vmatprep.subr.mxu0 0.0
    %382 = vmatpush1.msra.mxu0 %v364
    %383 = vmatprep.subr.mxu0 0.0
    %384 = vmatpush1.msra.mxu0 %v365
    %385 = vmatprep.subr.mxu0 0.0
    %386 = vmatpush1.msra.mxu0 %v366
    %387 = vmatprep.subr.mxu0 0.0
    %388 = vmatpush1.msra.mxu0 %v367
    %389 = vmatprep.subr.mxu0 0.0
    %390 = vmatpush1.msra.mxu0 %v368
    %391 = vmatprep.subr.mxu0 0.0
    %392 = vmatpush1.msra.mxu0 %v369
    %393 = vmatprep.subr.mxu0 0.0
    %394 = vmatpush1.msra.mxu0 %v370
    %395 = vmatprep.subr.mxu0 0.0
    %396 = vmatpush1.msra.mxu0 %v371
    %397 = vmatprep.subr.mxu0 0.0
    %398 = vmatpush1.msra.mxu0 %v372
    %399 = vmatprep.subr.mxu0 0.0
    %400 = vmatpush1.msra.mxu0 %v373
    %401 = vmatprep.subr.mxu0 0.0
    %402 = vmatpush1.msra.mxu0 %v374
    %403 = vmatprep.subr.mxu0 0.0
    %404 = vmatpush1.msra.mxu0 %v375
    %405 = vmatprep.subr.mxu0 0.0
    %406 = vmatpush1.msra.mxu0 %v376
    %407 = vmatprep.subr.mxu0 0.0
    %408 = vmatpush1.msra.mxu0 %v377
    %409 = vmatprep.subr.mxu0 0.0
    %410 = vmatpush1.msra.mxu0 %v378
    %411 = vmatprep.subr.mxu0 0.0
    %412 = vmatpush1.msra.mxu0 0.0
    %413 = vmatprep.subr.mxu0 0.0
    %414 = vmatpush1.msra.mxu0 0.0
    %415 = vmatprep.subr.mxu0 0.0
    %416 = vmatpush1.msra.mxu0 0.0
    %417 = vmatprep.subr.mxu0 0.0
    %418 = vmatpush1.msra.mxu0 0.0
    %419 = vmatprep.subr.mxu0 0.0
    %420 = vmatpush1.msra.mxu0 0.0
    %421 = vmatprep.subr.mxu0 0.0
    %422 = vmatpush1.msra.mxu0 0.0
    %423 = vmatprep.subr.mxu0 0.0
    %424 = vmatpush1.msra.mxu0 0.0
    %425 = vmatprep.subr.mxu0 0.0
    %426 = vmatpush1.msra.mxu0 0.0
    %427 = vmatprep.subr.mxu0 0.0
    %428 = vmatpush1.msra.mxu0 0.0
    %429 = vmatprep.subr.mxu0 0.0
    %430 = vmatpush1.msra.mxu0 0.0
    %431 = vmatprep.subr.mxu0 0.0
    %432 = vmatpush1.msra.mxu0 0.0
    %433 = vmatprep.subr.mxu0 0.0
    %434 = vmatpush1.msra.mxu0 0.0
    %435 = vmatprep.subr.mxu0 0.0
    %436 = vmatpush1.msra.mxu0 0.0
    %437 = vmatprep.subr.mxu0 0.0
    %438 = vmatpush1.msra.mxu0 0.0
    %439 = vmatprep.subr.mxu0 0.0
    %440 = vmatpush1.msra.mxu0 0.0
    %441 = vmatprep.subr.mxu0 0.0
    %442 = vmatpush1.msra.mxu0 0.0
    %443 = vmatprep.mubr.f32.mxu0 0.0
    %444 = vmatmul.mubr.f32.gmra.mrb[0].mxu0 %v362
    %v445 = vpop.f32.mrb[0].mxu0
    %v446 = vadd.f32 %v242, %v445
    %v447 = vpop.f32.mrb[0].mxu0
    %448 = vdwg.mxu0
    %v449 = vtanh.pop %v446
    %451 = vset.pattern.permute.xlu0 0
    %452 = vperm.xlu0 %451, %v76
    %v453 = vpop.permute.xlu0 %452
    %v455 = vmul.f32 %v453, %v361
    %v456 = vsub.f32 %v449, %v74
    %v457 = vmul.f32 %v455, %v456
    %v458 = vadd.f32 %v74, %v457
    %459 = vst [vmem:[#allocation2] sm:$0xff] %v458
    // Predicated region
    $region46: #{tpu_custom_call.1} parent=1 // pred_check
      %p460 = pneg %p68
    $region47: #{tpu_custom_call.1} parent=1 // pred_check_branch
      %462 = sbr.rel (%p460) target = $region49
    $region48: #{tpu_custom_call.1} parent=1 // pred_region
      %463 = vst [vmem:[#allocation9] sm:$0xff] %v458
    $region49: #{tpu_custom_call.1} parent=1 // pred_fallthru
      _
    // Predicated region
    $region50: #{tpu_custom_call.1} parent=1 // pred_check
      _
    $region51: #{tpu_custom_call.1} parent=1 // pred_check_branch
      %465 = sbr.rel (0) target = $region53
    $region52: #{tpu_custom_call.1} parent=1 // pred_region
      %s467 = ssub.s32 128, 128
      %468 = vsyncadd [#allocation5], %s467
      %s470 = sshll.u32 [#allocation9], 4
      %s471 = int_to_ptr.vmem [resolvable:$true] %s470
      %473 = dma.vmem_to_hbm [thread:$0]  %s471, 128, %s7, [#allocation5]
    $region53: #{tpu_custom_call.1} parent=1 // pred_fallthru
      _
    // Predicated region
    $region54: #{tpu_custom_call.1} parent=1 // pred_check
      _
    $region55: #{tpu_custom_call.1} parent=1 // pred_check_branch
      %475 = sbr.rel (0) target = $region57
    $region56: #{tpu_custom_call.1} parent=1 // pred_region
      %476 = dma.done [#allocation5], 128
    $region57: #{tpu_custom_call.1} parent=1 // pred_fallthru
      _
    %477 = vsyncpa [#allocation4], 1
    %478 = vsyncpa [#allocation7], 1
    %479 = vsyncpa [#allocation5], 1

</llo_original>
